<compile_context>
chip_gen: v6e
topology: v6e:2x2x1
jax: 0.10.0
libtpu: 0.0.40
codegen_flags: <defaults>
</compile_context>

<pallas_src>
import jax
import jax.numpy as jnp
from jax.experimental import pallas as pl
from jax.experimental.pallas import tpu as pltpu

embedding_size = 50
nb_classes = 128          # vocabulary size (nb_classes is external in the original file)


def _round_up(x, m):
    return (x + m - 1) // m * m


def _char_lm_kernel(ids_ref, emb_ref, out_ref):
    # ids_ref : (TM, W) int32   -- TM flattened (sentence, word) rows
    # emb_ref : (V, E)  float32 -- full embedding table (grid-invariant)
    # out_ref : (TM, E) float32
    TM, W = ids_ref.shape
    V = emb_ref.shape[0]

    ids = ids_ref[...]                                            # (TM, W)

    # Hoisted once: vocab index along the lane axis.
    vocab_iota = jax.lax.broadcasted_iota(jnp.int32, (TM, V), 1)  # (TM, V)

    # W-step compare+accumulate: pure VALU work on a (TM, V) tile per step.
    counts = jnp.zeros((TM, V), dtype=jnp.float32)
    for w in range(W):  # W is small and static -> unrolled at trace time
        counts = counts + (ids[:, w:w + 1] == vocab_iota).astype(jnp.float32)

    # Gather-via-matmul on the MXU: (TM, V) @ (V, E) -> (TM, E).
    word_emb = jnp.dot(counts, emb_ref[...], preferred_element_type=jnp.float32)

    # Fold the mean's 1/W scale into the (TM, E) result (single vmul).
    out_ref[...] = (word_emb * (1.0 / W)).astype(out_ref.dtype)


def character_language_model(ids, emb_table):
    """ids: (B, S, W) int32 char ids; emb_table: (V, E) float32 -> (B, S, E)."""
    B, S, W = ids.shape
    V, E = emb_table.shape
    M = B * S

    # Flatten (B, S) -> M and tile M in TM-row slabs; one grid step for small M.
    ids2 = ids.reshape(M, W)
    TM = min(256, _round_up(M, 8))
    M_pad = _round_up(M, TM)
    if M_pad != M:
        ids2 = jnp.pad(ids2, ((0, M_pad - M), (0, 0)))  # pad rows sliced off below

    grid = (M_pad // TM,)

    cost = pl.CostEstimate(
        flops=2 * M_pad * V * E,
        transcendentals=0,
        bytes_accessed=ids2.size * 4 + V * E * 4 + M_pad * E * 4,
    )

    out_flat = pl.pallas_call(
        _char_lm_kernel,
        out_shape=jax.ShapeDtypeStruct((M_pad, E), jnp.float32),
        grid_spec=pltpu.PrefetchScalarGridSpec(
            num_scalar_prefetch=0,
            grid=grid,
            in_specs=[
                pl.BlockSpec((TM, W), lambda i: (i, 0)),   # TM word-rows per step
                pl.BlockSpec((V, E), lambda i: (0, 0)),    # full table, grid-invariant
            ],
            out_specs=pl.BlockSpec((TM, E), lambda i: (i, 0)),
        ),
        compiler_params=pltpu.CompilerParams(
            dimension_semantics=("parallel",),   # independent row tiles (feeds both TCs on v7x)
        ),
        cost_estimate=cost,
    )(ids2, emb_table)

    return out_flat[:M].reshape(B, S, E)


if __name__ == "__main__":
    key = jax.random.PRNGKey(0)
    k_ids, k_emb = jax.random.split(key)

    B, S, W = 2, 8, 16          # 2 sentences, 8 words each, 16 chars per word
    ids = jax.random.randint(k_ids, (B, S, W), 0, nb_classes, dtype=jnp.int32)
    # nn.Embedding default init: N(0, 1)
    emb_table = jax.random.normal(k_emb, (nb_classes, embedding_size), dtype=jnp.float32)

    out = character_language_model(ids, emb_table)
    out = jax.block_until_ready(out)

    # pure-JAX reference: embedding lookup then mean over the char axis
    ref = jnp.take(emb_table, ids, axis=0).mean(axis=2)
    assert out.shape == (B, S, embedding_size)
    assert jnp.allclose(out, ref, atol=1e-5, rtol=1e-5)

    print("KERNEL_OK")
</pallas_src>

<mosaic_0001>
module attributes {stable_mosaic.version = 11 : i64} {
  func.func @_char_lm_kernel(%arg0: i32, %arg1: memref<16x16xi32, #tpu.memory_space<vmem>>, %arg2: memref<128x50xf32, #tpu.memory_space<vmem>>, %arg3: memref<16x50xf32, #tpu.memory_space<vmem>>) attributes {dimension_semantics = [#tpu.dimension_semantics<parallel>], iteration_bounds = array<i64: 1>, scalar_prefetch = 0 : i64, scratch_operands = 0 : i64, tpu.core_type = #tpu.core_type<tc>, window_params = [{transform_indices = @transform_0, window_bounds = array<i64: 16, 16>}, {pipeline_mode = #tpu.pipeline_mode<synchronous>, transform_indices = @transform_1, window_bounds = array<i64: 128, 50>}, {transform_indices = @transform_2, window_bounds = array<i64: 16, 50>}]} {
    %c0 = arith.constant 0 : index
    %c0_0 = arith.constant 0 : index
    %0 = vector.load %arg1[%c0, %c0_0] : memref<16x16xi32, #tpu.memory_space<vmem>>, vector<16x16xi32>
    %1 = tpu.iota {dimensions = array<i32: 1>} : vector<16x128xi32>
    %cst = arith.constant 0.000000e+00 : f32
    %2 = vector.broadcast %cst : f32 to vector<16x128xf32>
    %3 = vector.extract_strided_slice %0 {offsets = [0, 0], sizes = [16, 1], strides = [1, 1]} : vector<16x16xi32> to vector<16x1xi32>
    %4 = vector.broadcast %3 : vector<16x1xi32> to vector<16x128xi32>
    %5 = arith.cmpi eq, %4, %1 : vector<16x128xi32>
    %6 = arith.extui %5 : vector<16x128xi1> to vector<16x128xi32>
    %7 = arith.sitofp %6 : vector<16x128xi32> to vector<16x128xf32>
    %8 = arith.addf %2, %7 : vector<16x128xf32>
    %9 = vector.extract_strided_slice %0 {offsets = [0, 1], sizes = [16, 1], strides = [1, 1]} : vector<16x16xi32> to vector<16x1xi32>
    %10 = vector.broadcast %9 : vector<16x1xi32> to vector<16x128xi32>
    %11 = arith.cmpi eq, %10, %1 : vector<16x128xi32>
    %12 = arith.extui %11 : vector<16x128xi1> to vector<16x128xi32>
    %13 = arith.sitofp %12 : vector<16x128xi32> to vector<16x128xf32>
    %14 = arith.addf %8, %13 : vector<16x128xf32>
    %15 = vector.extract_strided_slice %0 {offsets = [0, 2], sizes = [16, 1], strides = [1, 1]} : vector<16x16xi32> to vector<16x1xi32>
    %16 = vector.broadcast %15 : vector<16x1xi32> to vector<16x128xi32>
    %17 = arith.cmpi eq, %16, %1 : vector<16x128xi32>
    %18 = arith.extui %17 : vector<16x128xi1> to vector<16x128xi32>
    %19 = arith.sitofp %18 : vector<16x128xi32> to vector<16x128xf32>
    %20 = arith.addf %14, %19 : vector<16x128xf32>
    %21 = vector.extract_strided_slice %0 {offsets = [0, 3], sizes = [16, 1], strides = [1, 1]} : vector<16x16xi32> to vector<16x1xi32>
    %22 = vector.broadcast %21 : vector<16x1xi32> to vector<16x128xi32>
    %23 = arith.cmpi eq, %22, %1 : vector<16x128xi32>
    %24 = arith.extui %23 : vector<16x128xi1> to vector<16x128xi32>
    %25 = arith.sitofp %24 : vector<16x128xi32> to vector<16x128xf32>
    %26 = arith.addf %20, %25 : vector<16x128xf32>
    %27 = vector.extract_strided_slice %0 {offsets = [0, 4], sizes = [16, 1], strides = [1, 1]} : vector<16x16xi32> to vector<16x1xi32>
    %28 = vector.broadcast %27 : vector<16x1xi32> to vector<16x128xi32>
    %29 = arith.cmpi eq, %28, %1 : vector<16x128xi32>
    %30 = arith.extui %29 : vector<16x128xi1> to vector<16x128xi32>
    %31 = arith.sitofp %30 : vector<16x128xi32> to vector<16x128xf32>
    %32 = arith.addf %26, %31 : vector<16x128xf32>
    %33 = vector.extract_strided_slice %0 {offsets = [0, 5], sizes = [16, 1], strides = [1, 1]} : vector<16x16xi32> to vector<16x1xi32>
    %34 = vector.broadcast %33 : vector<16x1xi32> to vector<16x128xi32>
    %35 = arith.cmpi eq, %34, %1 : vector<16x128xi32>
    %36 = arith.extui %35 : vector<16x128xi1> to vector<16x128xi32>
    %37 = arith.sitofp %36 : vector<16x128xi32> to vector<16x128xf32>
    %38 = arith.addf %32, %37 : vector<16x128xf32>
    %39 = vector.extract_strided_slice %0 {offsets = [0, 6], sizes = [16, 1], strides = [1, 1]} : vector<16x16xi32> to vector<16x1xi32>
    %40 = vector.broadcast %39 : vector<16x1xi32> to vector<16x128xi32>
    %41 = arith.cmpi eq, %40, %1 : vector<16x128xi32>
    %42 = arith.extui %41 : vector<16x128xi1> to vector<16x128xi32>
    %43 = arith.sitofp %42 : vector<16x128xi32> to vector<16x128xf32>
    %44 = arith.addf %38, %43 : vector<16x128xf32>
    %45 = vector.extract_strided_slice %0 {offsets = [0, 7], sizes = [16, 1], strides = [1, 1]} : vector<16x16xi32> to vector<16x1xi32>
    %46 = vector.broadcast %45 : vector<16x1xi32> to vector<16x128xi32>
    %47 = arith.cmpi eq, %46, %1 : vector<16x128xi32>
    %48 = arith.extui %47 : vector<16x128xi1> to vector<16x128xi32>
    %49 = arith.sitofp %48 : vector<16x128xi32> to vector<16x128xf32>
    %50 = arith.addf %44, %49 : vector<16x128xf32>
    %51 = vector.extract_strided_slice %0 {offsets = [0, 8], sizes = [16, 1], strides = [1, 1]} : vector<16x16xi32> to vector<16x1xi32>
    %52 = vector.broadcast %51 : vector<16x1xi32> to vector<16x128xi32>
    %53 = arith.cmpi eq, %52, %1 : vector<16x128xi32>
    %54 = arith.extui %53 : vector<16x128xi1> to vector<16x128xi32>
    %55 = arith.sitofp %54 : vector<16x128xi32> to vector<16x128xf32>
    %56 = arith.addf %50, %55 : vector<16x128xf32>
    %57 = vector.extract_strided_slice %0 {offsets = [0, 9], sizes = [16, 1], strides = [1, 1]} : vector<16x16xi32> to vector<16x1xi32>
    %58 = vector.broadcast %57 : vector<16x1xi32> to vector<16x128xi32>
    %59 = arith.cmpi eq, %58, %1 : vector<16x128xi32>
    %60 = arith.extui %59 : vector<16x128xi1> to vector<16x128xi32>
    %61 = arith.sitofp %60 : vector<16x128xi32> to vector<16x128xf32>
    %62 = arith.addf %56, %61 : vector<16x128xf32>
    %63 = vector.extract_strided_slice %0 {offsets = [0, 10], sizes = [16, 1], strides = [1, 1]} : vector<16x16xi32> to vector<16x1xi32>
    %64 = vector.broadcast %63 : vector<16x1xi32> to vector<16x128xi32>
    %65 = arith.cmpi eq, %64, %1 : vector<16x128xi32>
    %66 = arith.extui %65 : vector<16x128xi1> to vector<16x128xi32>
    %67 = arith.sitofp %66 : vector<16x128xi32> to vector<16x128xf32>
    %68 = arith.addf %62, %67 : vector<16x128xf32>
    %69 = vector.extract_strided_slice %0 {offsets = [0, 11], sizes = [16, 1], strides = [1, 1]} : vector<16x16xi32> to vector<16x1xi32>
    %70 = vector.broadcast %69 : vector<16x1xi32> to vector<16x128xi32>
    %71 = arith.cmpi eq, %70, %1 : vector<16x128xi32>
    %72 = arith.extui %71 : vector<16x128xi1> to vector<16x128xi32>
    %73 = arith.sitofp %72 : vector<16x128xi32> to vector<16x128xf32>
    %74 = arith.addf %68, %73 : vector<16x128xf32>
    %75 = vector.extract_strided_slice %0 {offsets = [0, 12], sizes = [16, 1], strides = [1, 1]} : vector<16x16xi32> to vector<16x1xi32>
    %76 = vector.broadcast %75 : vector<16x1xi32> to vector<16x128xi32>
    %77 = arith.cmpi eq, %76, %1 : vector<16x128xi32>
    %78 = arith.extui %77 : vector<16x128xi1> to vector<16x128xi32>
    %79 = arith.sitofp %78 : vector<16x128xi32> to vector<16x128xf32>
    %80 = arith.addf %74, %79 : vector<16x128xf32>
    %81 = vector.extract_strided_slice %0 {offsets = [0, 13], sizes = [16, 1], strides = [1, 1]} : vector<16x16xi32> to vector<16x1xi32>
    %82 = vector.broadcast %81 : vector<16x1xi32> to vector<16x128xi32>
    %83 = arith.cmpi eq, %82, %1 : vector<16x128xi32>
    %84 = arith.extui %83 : vector<16x128xi1> to vector<16x128xi32>
    %85 = arith.sitofp %84 : vector<16x128xi32> to vector<16x128xf32>
    %86 = arith.addf %80, %85 : vector<16x128xf32>
    %87 = vector.extract_strided_slice %0 {offsets = [0, 14], sizes = [16, 1], strides = [1, 1]} : vector<16x16xi32> to vector<16x1xi32>
    %88 = vector.broadcast %87 : vector<16x1xi32> to vector<16x128xi32>
    %89 = arith.cmpi eq, %88, %1 : vector<16x128xi32>
    %90 = arith.extui %89 : vector<16x128xi1> to vector<16x128xi32>
    %91 = arith.sitofp %90 : vector<16x128xi32> to vector<16x128xf32>
    %92 = arith.addf %86, %91 : vector<16x128xf32>
    %93 = vector.extract_strided_slice %0 {offsets = [0, 15], sizes = [16, 1], strides = [1, 1]} : vector<16x16xi32> to vector<16x1xi32>
    %94 = vector.broadcast %93 : vector<16x1xi32> to vector<16x128xi32>
    %95 = arith.cmpi eq, %94, %1 : vector<16x128xi32>
    %96 = arith.extui %95 : vector<16x128xi1> to vector<16x128xi32>
    %97 = arith.sitofp %96 : vector<16x128xi32> to vector<16x128xf32>
    %98 = arith.addf %92, %97 : vector<16x128xf32>
    %c0_1 = arith.constant 0 : index
    %c0_2 = arith.constant 0 : index
    %99 = vector.load %arg2[%c0_1, %c0_2] : memref<128x50xf32, #tpu.memory_space<vmem>>, vector<128x50xf32>
    %cst_3 = arith.constant dense<0.000000e+00> : vector<16x50xf32>
    %100 = tpu.matmul %98, %99, %cst_3 {dimension_numbers = #tpu.dot_dimension_numbers<[1], [0], [0], [1], [0, 0, 1, 1], [], []>} : vector<16x128xf32>, vector<128x50xf32>, vector<16x50xf32> -> vector<16x50xf32>
    %cst_4 = arith.constant 6.250000e-02 : f32
    %101 = vector.broadcast %cst_4 : f32 to vector<16x50xf32>
    %102 = arith.mulf %100, %101 : vector<16x50xf32>
    %c0_5 = arith.constant 0 : index
    %c0_6 = arith.constant 0 : index
    %103 = vector.load %arg3[%c0_5, %c0_6] : memref<16x50xf32, #tpu.memory_space<vmem>>, vector<16x50xf32>
    tpu.vector_store %arg3[%c0_5, %c0_6], %102 {strides = array<i32>} : memref<16x50xf32, #tpu.memory_space<vmem>>, vector<16x50xf32>,
    return
  }
  func.func @transform_0(%arg0: i32) -> (i32, i32) {
    %c0_i32 = arith.constant 0 : i32
    %c0_i32_0 = arith.constant 0 : i32
    return %arg0, %c0_i32 : i32, i32
  }
  func.func @transform_1(%arg0: i32) -> (i32, i32) {
    %c0_i32 = arith.constant 0 : i32
    %c0_i32_0 = arith.constant 0 : i32
    %c0_i32_1 = arith.constant 0 : i32
    return %c0_i32, %c0_i32_0 : i32, i32
  }
  func.func @transform_2(%arg0: i32) -> (i32, i32) {
    %c0_i32 = arith.constant 0 : i32
    %c0_i32_0 = arith.constant 0 : i32
    return %arg0, %c0_i32 : i32, i32
  }
}

</mosaic_0001>

<llo_original>
// kernel: tpu_custom_call.1
$region0: #{tpu_custom_call.1}
  #allocation0 [shape = 'u32[]', space=smem, size = 0x4, offset = 0x4, fixed_abs, tag = 'smem constant byte address 0x4 - core index']
  #allocation1 [shape = 'u32[144,128]{1,0:T(1,128)}', space=vmem, size = 0x12000, scoped, tag = 'internal scratch']
  %s0 = inlined_call_operand.vmem [shape: s32[16,16], index: 0, kind: input, shape index: {}]
  %s1 = inlined_call_operand.vmem [shape: f32[128,50], index: 1, kind: input, shape index: {}]
  %s2 = inlined_call_operand.hbm [shape: f32[16,50], index: 2, kind: output, shape index: {}]
  %s3 = sld [smem:[#allocation0]]
  $region18: #{tpu_custom_call.1} parent=0
    _
  %s5 = ssub.s32 1, %s3
  %s6 = scalar_select 0, %s5, %s3
  $region1: #{tpu_custom_call.1} parent=0
    #allocation2 [shape = 'u8[8192]{0}', space=vmem, size = 0x2000, scoped, tag = 'output window, operand 0, single buffered']
    #allocation3 [shape = 's32[1]{0}', space=sflag, size = 0x4, scoped, tag = 'scoped memory for tpu_custom_call.1']
    %7 = vsyncpa [#allocation3], 0
    // Predicated region
    $region2: #{tpu_custom_call.1} parent=1 // pred_check
      _
    $region3: #{tpu_custom_call.1} parent=1 // pred_check_branch
      %9 = sbr.rel (0) target = $region5
    $region4: #{tpu_custom_call.1} parent=1 // pred_region
      _
    $region5: #{tpu_custom_call.1} parent=1 // pred_fallthru
      _
    // Predicated region
    $region6: #{tpu_custom_call.1} parent=1 // pred_check
      _
    $region7: #{tpu_custom_call.1} parent=1 // pred_check_branch
      %11 = sbr.rel (0) target = $region9
    $region8: #{tpu_custom_call.1} parent=1 // pred_region
      _
    $region9: #{tpu_custom_call.1} parent=1 // pred_fallthru
      _
    %v12 = vld [vmem:[%s0] sm:$0xff]
    %v13 = vld [vmem:[%s0 + $0x8] sm:$0xff]
    %v14 = vlaneseq
    %v15 = vand.u32 %v14, 127
    %16 = vset.pattern.permute.xlu0 0
    %17 = vperm.xlu0 %16, %v12
    %v18 = vpop.permute.xlu0 %17
    %19 = vset.pattern.permute.xlu0 0
    %20 = vperm.xlu0 %19, %v13
    %v21 = vpop.permute.xlu0 %20
    %vm22 = vcmp.eq.s32.totalorder %v18, %v15
    %vm23 = vcmp.eq.s32.totalorder %v21, %v15
    %v24 = vsel %vm22, 1, 0
    %v25 = vsel %vm23, 1, 0
    %v26 = vcvt.s32.f32 %v24
    %v27 = vcvt.s32.f32 %v25
    %v28 = vadd.f32 %v26, 0.0
    %v29 = vadd.f32 %v27, 0.0
    %30 = vset.pattern.permute.xlu0 1
    %31 = vperm.xlu0 %30, %v12
    %v32 = vpop.permute.xlu0 %31
    %33 = vset.pattern.permute.xlu0 1
    %34 = vperm.xlu0 %33, %v13
    %v35 = vpop.permute.xlu0 %34
    %vm36 = vcmp.eq.s32.totalorder %v32, %v15
    %vm37 = vcmp.eq.s32.totalorder %v35, %v15
    %v38 = vsel %vm36, 1, 0
    %v39 = vsel %vm37, 1, 0
    %v40 = vcvt.s32.f32 %v38
    %v41 = vcvt.s32.f32 %v39
    %v42 = vadd.f32 %v28, %v40
    %v43 = vadd.f32 %v29, %v41
    %44 = vset.pattern.permute.xlu0 2
    %45 = vperm.xlu0 %44, %v12
    %v46 = vpop.permute.xlu0 %45
    %47 = vset.pattern.permute.xlu0 2
    %48 = vperm.xlu0 %47, %v13
    %v49 = vpop.permute.xlu0 %48
    %vm50 = vcmp.eq.s32.totalorder %v46, %v15
    %vm51 = vcmp.eq.s32.totalorder %v49, %v15
    %v52 = vsel %vm50, 1, 0
    %v53 = vsel %vm51, 1, 0
    %v54 = vcvt.s32.f32 %v52
    %v55 = vcvt.s32.f32 %v53
    %v56 = vadd.f32 %v42, %v54
    %v57 = vadd.f32 %v43, %v55
    %58 = vset.pattern.permute.xlu0 3
    %59 = vperm.xlu0 %58, %v12
    %v60 = vpop.permute.xlu0 %59
    %61 = vset.pattern.permute.xlu0 3
    %62 = vperm.xlu0 %61, %v13
    %v63 = vpop.permute.xlu0 %62
    %vm64 = vcmp.eq.s32.totalorder %v60, %v15
    %vm65 = vcmp.eq.s32.totalorder %v63, %v15
    %v66 = vsel %vm64, 1, 0
    %v67 = vsel %vm65, 1, 0
    %v68 = vcvt.s32.f32 %v66
    %v69 = vcvt.s32.f32 %v67
    %v70 = vadd.f32 %v56, %v68
    %v71 = vadd.f32 %v57, %v69
    %72 = vset.pattern.permute.xlu0 4
    %73 = vperm.xlu0 %72, %v12
    %v74 = vpop.permute.xlu0 %73
    %75 = vset.pattern.permute.xlu0 4
    %76 = vperm.xlu0 %75, %v13
    %v77 = vpop.permute.xlu0 %76
    %vm78 = vcmp.eq.s32.totalorder %v74, %v15
    %vm79 = vcmp.eq.s32.totalorder %v77, %v15
    %v80 = vsel %vm78, 1, 0
    %v81 = vsel %vm79, 1, 0
    %v82 = vcvt.s32.f32 %v80
    %v83 = vcvt.s32.f32 %v81
    %v84 = vadd.f32 %v70, %v82
    %v85 = vadd.f32 %v71, %v83
    %86 = vset.pattern.permute.xlu0 5
    %87 = vperm.xlu0 %86, %v12
    %v88 = vpop.permute.xlu0 %87
    %89 = vset.pattern.permute.xlu0 5
    %90 = vperm.xlu0 %89, %v13
    %v91 = vpop.permute.xlu0 %90
    %vm92 = vcmp.eq.s32.totalorder %v88, %v15
    %vm93 = vcmp.eq.s32.totalorder %v91, %v15
    %v94 = vsel %vm92, 1, 0
    %v95 = vsel %vm93, 1, 0
    %v96 = vcvt.s32.f32 %v94
    %v97 = vcvt.s32.f32 %v95
    %v98 = vadd.f32 %v84, %v96
    %v99 = vadd.f32 %v85, %v97
    %100 = vset.pattern.permute.xlu0 6
    %101 = vperm.xlu0 %100, %v12
    %v102 = vpop.permute.xlu0 %101
    %103 = vset.pattern.permute.xlu0 6
    %104 = vperm.xlu0 %103, %v13
    %v105 = vpop.permute.xlu0 %104
    %vm106 = vcmp.eq.s32.totalorder %v102, %v15
    %vm107 = vcmp.eq.s32.totalorder %v105, %v15
    %v108 = vsel %vm106, 1, 0
    %v109 = vsel %vm107, 1, 0
    %v110 = vcvt.s32.f32 %v108
    %v111 = vcvt.s32.f32 %v109
    %v112 = vadd.f32 %v98, %v110
    %v113 = vadd.f32 %v99, %v111
    %114 = vset.pattern.permute.xlu0 7
    %115 = vperm.xlu0 %114, %v12
    %v116 = vpop.permute.xlu0 %115
    %117 = vset.pattern.permute.xlu0 7
    %118 = vperm.xlu0 %117, %v13
    %v119 = vpop.permute.xlu0 %118
    %vm120 = vcmp.eq.s32.totalorder %v116, %v15
    %vm121 = vcmp.eq.s32.totalorder %v119, %v15
    %v122 = vsel %vm120, 1, 0
    %v123 = vsel %vm121, 1, 0
    %v124 = vcvt.s32.f32 %v122
    %v125 = vcvt.s32.f32 %v123
    %v126 = vadd.f32 %v112, %v124
    %v127 = vadd.f32 %v113, %v125
    %128 = vset.pattern.permute.xlu0 8
    %129 = vperm.xlu0 %128, %v12
    %v130 = vpop.permute.xlu0 %129
    %131 = vset.pattern.permute.xlu0 8
    %132 = vperm.xlu0 %131, %v13
    %v133 = vpop.permute.xlu0 %132
    %vm134 = vcmp.eq.s32.totalorder %v130, %v15
    %vm135 = vcmp.eq.s32.totalorder %v133, %v15
    %v136 = vsel %vm134, 1, 0
    %v137 = vsel %vm135, 1, 0
    %v138 = vcvt.s32.f32 %v136
    %v139 = vcvt.s32.f32 %v137
    %v140 = vadd.f32 %v126, %v138
    %v141 = vadd.f32 %v127, %v139
    %142 = vset.pattern.permute.xlu0 9
    %143 = vperm.xlu0 %142, %v12
    %v144 = vpop.permute.xlu0 %143
    %145 = vset.pattern.permute.xlu0 9
    %146 = vperm.xlu0 %145, %v13
    %v147 = vpop.permute.xlu0 %146
    %vm148 = vcmp.eq.s32.totalorder %v144, %v15
    %vm149 = vcmp.eq.s32.totalorder %v147, %v15
    %v150 = vsel %vm148, 1, 0
    %v151 = vsel %vm149, 1, 0
    %v152 = vcvt.s32.f32 %v150
    %v153 = vcvt.s32.f32 %v151
    %v154 = vadd.f32 %v140, %v152
    %v155 = vadd.f32 %v141, %v153
    %156 = vset.pattern.permute.xlu0 10
    %157 = vperm.xlu0 %156, %v12
    %v158 = vpop.permute.xlu0 %157
    %159 = vset.pattern.permute.xlu0 10
    %160 = vperm.xlu0 %159, %v13
    %v161 = vpop.permute.xlu0 %160
    %vm162 = vcmp.eq.s32.totalorder %v158, %v15
    %vm163 = vcmp.eq.s32.totalorder %v161, %v15
    %v164 = vsel %vm162, 1, 0
    %v165 = vsel %vm163, 1, 0
    %v166 = vcvt.s32.f32 %v164
    %v167 = vcvt.s32.f32 %v165
    %v168 = vadd.f32 %v154, %v166
    %v169 = vadd.f32 %v155, %v167
    %170 = vset.pattern.permute.xlu0 11
    %171 = vperm.xlu0 %170, %v12
    %v172 = vpop.permute.xlu0 %171
    %173 = vset.pattern.permute.xlu0 11
    %174 = vperm.xlu0 %173, %v13
    %v175 = vpop.permute.xlu0 %174
    %vm176 = vcmp.eq.s32.totalorder %v172, %v15
    %vm177 = vcmp.eq.s32.totalorder %v175, %v15
    %v178 = vsel %vm176, 1, 0
    %v179 = vsel %vm177, 1, 0
    %v180 = vcvt.s32.f32 %v178
    %v181 = vcvt.s32.f32 %v179
    %v182 = vadd.f32 %v168, %v180
    %v183 = vadd.f32 %v169, %v181
    %184 = vset.pattern.permute.xlu0 12
    %185 = vperm.xlu0 %184, %v12
    %v186 = vpop.permute.xlu0 %185
    %187 = vset.pattern.permute.xlu0 12
    %188 = vperm.xlu0 %187, %v13
    %v189 = vpop.permute.xlu0 %188
    %vm190 = vcmp.eq.s32.totalorder %v186, %v15
    %vm191 = vcmp.eq.s32.totalorder %v189, %v15
    %v192 = vsel %vm190, 1, 0
    %v193 = vsel %vm191, 1, 0
    %v194 = vcvt.s32.f32 %v192
    %v195 = vcvt.s32.f32 %v193
    %v196 = vadd.f32 %v182, %v194
    %v197 = vadd.f32 %v183, %v195
    %198 = vset.pattern.permute.xlu0 13
    %199 = vperm.xlu0 %198, %v12
    %v200 = vpop.permute.xlu0 %199
    %201 = vset.pattern.permute.xlu0 13
    %202 = vperm.xlu0 %201, %v13
    %v203 = vpop.permute.xlu0 %202
    %vm204 = vcmp.eq.s32.totalorder %v200, %v15
    %vm205 = vcmp.eq.s32.totalorder %v203, %v15
    %v206 = vsel %vm204, 1, 0
    %v207 = vsel %vm205, 1, 0
    %v208 = vcvt.s32.f32 %v206
    %v209 = vcvt.s32.f32 %v207
    %v210 = vadd.f32 %v196, %v208
    %v211 = vadd.f32 %v197, %v209
    %212 = vset.pattern.permute.xlu0 14
    %213 = vperm.xlu0 %212, %v12
    %v214 = vpop.permute.xlu0 %213
    %215 = vset.pattern.permute.xlu0 14
    %216 = vperm.xlu0 %215, %v13
    %v217 = vpop.permute.xlu0 %216
    %vm218 = vcmp.eq.s32.totalorder %v214, %v15
    %vm219 = vcmp.eq.s32.totalorder %v217, %v15
    %v220 = vsel %vm218, 1, 0
    %v221 = vsel %vm219, 1, 0
    %v222 = vcvt.s32.f32 %v220
    %v223 = vcvt.s32.f32 %v221
    %v224 = vadd.f32 %v210, %v222
    %v225 = vadd.f32 %v211, %v223
    %226 = vset.pattern.permute.xlu0 15
    %227 = vperm.xlu0 %226, %v12
    %v228 = vpop.permute.xlu0 %227
    %229 = vset.pattern.permute.xlu0 15
    %230 = vperm.xlu0 %229, %v13
    %v231 = vpop.permute.xlu0 %230
    %vm232 = vcmp.eq.s32.totalorder %v228, %v15
    %vm233 = vcmp.eq.s32.totalorder %v231, %v15
    %v234 = vsel %vm232, 1, 0
    %v235 = vsel %vm233, 1, 0
    %v236 = vcvt.s32.f32 %v234
    %v237 = vcvt.s32.f32 %v235
    %v238 = vadd.f32 %v224, %v236
    %v239 = vadd.f32 %v225, %v237
    %v240 = vld [vmem:[%s1] sm:$0xff]
    %v241 = vld [vmem:[%s1 + $0x8] sm:$0xff]
    %v242 = vld [vmem:[%s1 + $0x10] sm:$0xff]
    %v243 = vld [vmem:[%s1 + $0x18] sm:$0xff]
    %v244 = vld [vmem:[%s1 + $0x20] sm:$0xff]
    %v245 = vld [vmem:[%s1 + $0x28] sm:$0xff]
    %v246 = vld [vmem:[%s1 + $0x30] sm:$0xff]
    %v247 = vld [vmem:[%s1 + $0x38] sm:$0xff]
    %v248 = vld [vmem:[%s1 + $0x40] sm:$0xff]
    %v249 = vld [vmem:[%s1 + $0x48] sm:$0xff]
    %v250 = vld [vmem:[%s1 + $0x50] sm:$0xff]
    %v251 = vld [vmem:[%s1 + $0x58] sm:$0xff]
    %v252 = vld [vmem:[%s1 + $0x60] sm:$0xff]
    %v253 = vld [vmem:[%s1 + $0x68] sm:$0xff]
    %v254 = vld [vmem:[%s1 + $0x70] sm:$0xff]
    %v255 = vld [vmem:[%s1 + $0x78] sm:$0xff]
    %256 = vmatprep.subr.mxu0 0.0
    %257 = vmatpush1.msra.mxu0 %v255
    %258 = vmatprep.subr.mxu0 0.0
    %259 = vmatpush1.msra.mxu0 %v254
    %260 = vmatprep.subr.mxu0 0.0
    %261 = vmatpush1.msra.mxu0 %v253
    %262 = vmatprep.subr.mxu0 0.0
    %263 = vmatpush1.msra.mxu0 %v252
    %264 = vmatprep.subr.mxu0 0.0
    %265 = vmatpush1.msra.mxu0 %v251
    %266 = vmatprep.subr.mxu0 0.0
    %267 = vmatpush1.msra.mxu0 %v250
    %268 = vmatprep.subr.mxu0 0.0
    %269 = vmatpush1.msra.mxu0 %v249
    %270 = vmatprep.subr.mxu0 0.0
    %271 = vmatpush1.msra.mxu0 %v248
    %272 = vmatprep.subr.mxu0 0.0
    %273 = vmatpush1.msra.mxu0 %v247
    %274 = vmatprep.subr.mxu0 0.0
    %275 = vmatpush1.msra.mxu0 %v246
    %276 = vmatprep.subr.mxu0 0.0
    %277 = vmatpush1.msra.mxu0 %v245
    %278 = vmatprep.subr.mxu0 0.0
    %279 = vmatpush1.msra.mxu0 %v244
    %280 = vmatprep.subr.mxu0 0.0
    %281 = vmatpush1.msra.mxu0 %v243
    %282 = vmatprep.subr.mxu0 0.0
    %283 = vmatpush1.msra.mxu0 %v242
    %284 = vmatprep.subr.mxu0 0.0
    %285 = vmatpush1.msra.mxu0 %v241
    %286 = vmatprep.subr.mxu0 0.0
    %287 = vmatpush1.msra.mxu0 %v240
    %288 = vmatprep.subr.mxu0 0.0
    %289 = vmatpush2.msra.mxu0 0.0
    %290 = vmatprep.subr.mxu0 0.0
    %291 = vmatpush2.msra.mxu0 0.0
    %292 = vmatprep.subr.mxu0 0.0
    %293 = vmatpush2.msra.mxu0 0.0
    %294 = vmatprep.subr.mxu0 0.0
    %295 = vmatpush2.msra.mxu0 0.0
    %296 = vmatprep.subr.mxu0 0.0
    %297 = vmatpush2.msra.mxu0 0.0
    %298 = vmatprep.subr.mxu0 0.0
    %299 = vmatpush2.msra.mxu0 0.0
    %300 = vmatprep.subr.mxu0 0.0
    %301 = vmatpush2.msra.mxu0 0.0
    %302 = vmatprep.subr.mxu0 0.0
    %303 = vmatpush2.msra.mxu0 0.0
    %304 = vmatprep.subr.mxu0 0.0
    %305 = vmatpush2.msra.mxu0 0.0
    %306 = vmatprep.subr.mxu0 0.0
    %307 = vmatpush2.msra.mxu0 0.0
    %308 = vmatprep.subr.mxu0 0.0
    %309 = vmatpush2.msra.mxu0 0.0
    %310 = vmatprep.subr.mxu0 0.0
    %311 = vmatpush2.msra.mxu0 0.0
    %312 = vmatprep.subr.mxu0 0.0
    %313 = vmatpush2.msra.mxu0 0.0
    %314 = vmatprep.subr.mxu0 0.0
    %315 = vmatpush2.msra.mxu0 0.0
    %316 = vmatprep.subr.mxu0 0.0
    %317 = vmatpush2.msra.mxu0 0.0
    %318 = vmatprep.subr.mxu0 0.0
    %319 = vmatpush2.msra.mxu0 0.0
    %320 = vmatprep.mubr.f32.mxu0 0.0
    %321 = vmatmul.mubr.f32.gmra.mxu0 %v238
    %v322 = vpop.f32.mrf.mxu0
    %v323 = vadd.f32 0.0, %v322
    %v324 = vpop.f32.mrf.mxu0
    %325 = vmatprep.mubr.f32.mxu0 0.0
    %326 = vmatmul.mubr.f32.gmra.mxu0 %v239
    %v327 = vpop.f32.mrf.mxu0
    %v328 = vadd.f32 0.0, %v327
    %v329 = vpop.f32.mrf.mxu0
    %330 = vdwg.mxu0
    %v331 = vmul.f32 %v323, 0.0625
    %v332 = vmul.f32 %v328, 0.0625
    %vm333 = vcmask 408576
    %334 = vst.msk [vmem:[#allocation2] sm:$0xff] %vm333, %v331
    %335 = vst.msk [vmem:[#allocation2 + $0x8] sm:$0xff] %vm333, %v332
    // Predicated region
    $region10: #{tpu_custom_call.1} parent=1 // pred_check
      _
    $region11: #{tpu_custom_call.1} parent=1 // pred_check_branch
      %337 = sbr.rel (0) target = $region13
    $region12: #{tpu_custom_call.1} parent=1 // pred_region
      %s339 = ssub.s32 256, 256
      %340 = vsyncadd [#allocation3], %s339
      %s341 = sshll.u32 [#allocation2], 4
      %s342 = int_to_ptr.vmem [resolvable:$true] %s341
      %347 = dma.vmem_to_hbm [thread:$0]  %s342, 256, %s2, [#allocation3], 128, 128, 8
    $region13: #{tpu_custom_call.1} parent=1 // pred_fallthru
      _
    // Predicated region
    $region14: #{tpu_custom_call.1} parent=1 // pred_check
      _
    $region15: #{tpu_custom_call.1} parent=1 // pred_check_branch
      %349 = sbr.rel (0) target = $region17
    $region16: #{tpu_custom_call.1} parent=1 // pred_region
      %350 = dma.done [#allocation3], 256
    $region17: #{tpu_custom_call.1} parent=1 // pred_fallthru
      _
    %351 = vsyncpa [#allocation3], 1

</llo_original>
